<compile_context>
chip_gen: v7x
topology: tpu7x:2x2x1
jax: 0.10.0
libtpu: 0.0.40
codegen_flags: <defaults>
</compile_context>

<pallas_src>
import jax
import jax.numpy as jnp
import numpy as np
from jax import lax
from jax.experimental import pallas as pl
from jax.experimental.pallas import tpu as pltpu


# ----------------------------------------------------------------------------
# Fused MLP kernel: one batch-tile of the full 3-layer forward, all in VMEM.
# ----------------------------------------------------------------------------
def mlp_kernel(x_ref, w1_ref, b1_ref, w2_ref, b2_ref, w3_ref, b3_ref, o_ref):
    h = jnp.dot(x_ref[...], w1_ref[...], preferred_element_type=jnp.float32)
    h = jnp.maximum(h + b1_ref[...], 0.0)                       # Linear1 + ReLU
    h = jnp.dot(h, w2_ref[...], preferred_element_type=jnp.float32)
    h = jnp.maximum(h + b2_ref[...], 0.0)                       # Linear2 + ReLU
    out = jnp.dot(h, w3_ref[...], preferred_element_type=jnp.float32)
    o_ref[...] = (out + b3_ref[...]).astype(o_ref.dtype)        # Linear3 (out_dim=1)


# ----------------------------------------------------------------------------
# Wrapper: single pallas_call, batch tiled on a parallel grid axis.
# ----------------------------------------------------------------------------
def regressor_forward(x, params, *, block_b=128):
    w1, b1, w2, b2, w3, b3 = params
    B, in_dim = x.shape
    hidden = w1.shape[1]
    out_dim = w3.shape[1]

    # Row tile: whole batch if it fits in one tile, otherwise a multiple of 8
    # (sublane alignment) and pad the batch up to a whole number of tiles.
    bb = min(block_b, B)
    if bb < B:
        bb = max(8, (bb // 8) * 8)
    B_pad = pl.cdiv(B, bb) * bb
    if B_pad != B:
        x = jnp.pad(x, ((0, B_pad - B), (0, 0)))
    grid = (B_pad // bb,)

    # Weights/biases are small: same (whole) block for every grid step, so the
    # pipeline keeps them resident in VMEM instead of re-fetching.
    rep = lambda shape: pl.BlockSpec(shape, lambda i: (0, 0))

    out = pl.pallas_call(
        mlp_kernel,
        out_shape=jax.ShapeDtypeStruct((B_pad, out_dim), jnp.float32),
        grid=grid,
        in_specs=[
            pl.BlockSpec((bb, in_dim), lambda i: (i, 0)),        # x rows
            rep((in_dim, hidden)),                               # w1
            rep((1, hidden)),                                    # b1
            rep((hidden, hidden)),                               # w2
            rep((1, hidden)),                                    # b2
            rep((hidden, out_dim)),                              # w3
            rep((1, out_dim)),                                   # b3
        ],
        out_specs=pl.BlockSpec((bb, out_dim), lambda i: (i, 0)),
        compiler_params=pltpu.CompilerParams(
            dimension_semantics=("parallel",)),
    )(x, w1, b1, w2, b2, w3, b3)

    return out[:B] if B_pad != B else out


# ----------------------------------------------------------------------------
# Deterministic parameters (stored pre-transposed: [in, out] GEMM form,
# i.e. fc.weight.T — a one-time host-side permutation).
# ----------------------------------------------------------------------------
def init_params(key, in_dim, hidden_dim, out_dim=1):
    ks = jax.random.split(key, 6)
    w1 = 0.1 * jax.random.normal(ks[0], (in_dim, hidden_dim), jnp.float32)
    b1 = 0.1 * jax.random.normal(ks[1], (1, hidden_dim), jnp.float32)
    w2 = 0.1 * jax.random.normal(ks[2], (hidden_dim, hidden_dim), jnp.float32)
    b2 = 0.1 * jax.random.normal(ks[3], (1, hidden_dim), jnp.float32)
    w3 = 0.1 * jax.random.normal(ks[4], (hidden_dim, out_dim), jnp.float32)
    b3 = 0.1 * jax.random.normal(ks[5], (1, out_dim), jnp.float32)
    return (w1, b1, w2, b2, w3, b3)


# ----------------------------------------------------------------------------
# Pure-JAX reference (matches torch: relu(relu(x@W1+b1)@W2+b2)@W3+b3)
# ----------------------------------------------------------------------------
def reference_forward(x, params):
    w1, b1, w2, b2, w3, b3 = params
    h = jnp.maximum(jnp.dot(x, w1, precision=lax.Precision.HIGHEST) + b1, 0.0)
    h = jnp.maximum(jnp.dot(h, w2, precision=lax.Precision.HIGHEST) + b2, 0.0)
    return jnp.dot(h, w3, precision=lax.Precision.HIGHEST) + b3


if __name__ == "__main__":
    # Small shapes consistent with the module: in_dim=32, hidden_dim=128
    # (lane-dense), out_dim=1 (fixed by nn.Linear(hidden, 1)), batch=64.
    B, IN_DIM, HIDDEN, OUT_DIM = 64, 32, 128, 1

    key = jax.random.PRNGKey(0)
    kx, kp = jax.random.split(key)
    x = jax.random.normal(kx, (B, IN_DIM), jnp.float32)
    params = init_params(kp, IN_DIM, HIDDEN, OUT_DIM)

    y = regressor_forward(x, params, block_b=128)
    y = jax.block_until_ready(y)

    y_ref = reference_forward(x, params)
    np.testing.assert_allclose(np.asarray(y), np.asarray(y_ref), rtol=2e-2, atol=2e-2)

    assert y.shape == (B, OUT_DIM)
    print("KERNEL_OK")
</pallas_src>

<mosaic_0001>
module attributes {stable_mosaic.version = 11 : i64} {
  func.func @mlp_kernel(%arg0: i32, %arg1: memref<64x32xf32, #tpu.memory_space<vmem>>, %arg2: memref<32x128xf32, #tpu.memory_space<vmem>>, %arg3: memref<1x128xf32, #tpu.memory_space<vmem>>, %arg4: memref<128x128xf32, #tpu.memory_space<vmem>>, %arg5: memref<1x128xf32, #tpu.memory_space<vmem>>, %arg6: memref<128x1xf32, #tpu.memory_space<vmem>>, %arg7: memref<1x1xf32, #tpu.memory_space<vmem>>, %arg8: memref<64x1xf32, #tpu.memory_space<vmem>>) attributes {dimension_semantics = [#tpu.dimension_semantics<parallel>], iteration_bounds = array<i64: 1>, scalar_prefetch = 0 : i64, scratch_operands = 0 : i64, tpu.core_type = #tpu.core_type<tc>, window_params = [{transform_indices = @transform_0, window_bounds = array<i64: 64, 32>}, {pipeline_mode = #tpu.pipeline_mode<synchronous>, transform_indices = @transform_1, window_bounds = array<i64: 32, 128>}, {pipeline_mode = #tpu.pipeline_mode<synchronous>, transform_indices = @transform_2, window_bounds = array<i64: 1, 128>}, {pipeline_mode = #tpu.pipeline_mode<synchronous>, transform_indices = @transform_3, window_bounds = array<i64: 128, 128>}, {pipeline_mode = #tpu.pipeline_mode<synchronous>, transform_indices = @transform_4, window_bounds = array<i64: 1, 128>}, {pipeline_mode = #tpu.pipeline_mode<synchronous>, transform_indices = @transform_5, window_bounds = array<i64: 128, 1>}, {pipeline_mode = #tpu.pipeline_mode<synchronous>, transform_indices = @transform_6, window_bounds = array<i64: 1, 1>}, {transform_indices = @transform_7, window_bounds = array<i64: 64, 1>}]} {
    %c0 = arith.constant 0 : index
    %c0_0 = arith.constant 0 : index
    %0 = vector.load %arg1[%c0, %c0_0] : memref<64x32xf32, #tpu.memory_space<vmem>>, vector<64x32xf32>
    %c0_1 = arith.constant 0 : index
    %c0_2 = arith.constant 0 : index
    %1 = vector.load %arg2[%c0_1, %c0_2] : memref<32x128xf32, #tpu.memory_space<vmem>>, vector<32x128xf32>
    %cst = arith.constant dense<0.000000e+00> : vector<64x128xf32>
    %2 = tpu.matmul %0, %1, %cst {dimension_numbers = #tpu.dot_dimension_numbers<[1], [0], [0], [1], [0, 0, 1, 1], [], []>} : vector<64x32xf32>, vector<32x128xf32>, vector<64x128xf32> -> vector<64x128xf32>
    %c0_3 = arith.constant 0 : index
    %c0_4 = arith.constant 0 : index
    %3 = vector.load %arg3[%c0_3, %c0_4] : memref<1x128xf32, #tpu.memory_space<vmem>>, vector<1x128xf32>
    %4 = vector.broadcast %3 : vector<1x128xf32> to vector<64x128xf32>
    %5 = arith.addf %2, %4 : vector<64x128xf32>
    %cst_5 = arith.constant 0.000000e+00 : f32
    %6 = vector.broadcast %cst_5 : f32 to vector<64x128xf32>
    %7 = arith.maximumf %5, %6 : vector<64x128xf32>
    %c0_6 = arith.constant 0 : index
    %c0_7 = arith.constant 0 : index
    %8 = vector.load %arg4[%c0_6, %c0_7] : memref<128x128xf32, #tpu.memory_space<vmem>>, vector<128x128xf32>
    %cst_8 = arith.constant dense<0.000000e+00> : vector<64x128xf32>
    %9 = tpu.matmul %7, %8, %cst_8 {dimension_numbers = #tpu.dot_dimension_numbers<[1], [0], [0], [1], [0, 0, 1, 1], [], []>} : vector<64x128xf32>, vector<128x128xf32>, vector<64x128xf32> -> vector<64x128xf32>
    %c0_9 = arith.constant 0 : index
    %c0_10 = arith.constant 0 : index
    %10 = vector.load %arg5[%c0_9, %c0_10] : memref<1x128xf32, #tpu.memory_space<vmem>>, vector<1x128xf32>
    %11 = vector.broadcast %10 : vector<1x128xf32> to vector<64x128xf32>
    %12 = arith.addf %9, %11 : vector<64x128xf32>
    %cst_11 = arith.constant 0.000000e+00 : f32
    %13 = vector.broadcast %cst_11 : f32 to vector<64x128xf32>
    %14 = arith.maximumf %12, %13 : vector<64x128xf32>
    %c0_12 = arith.constant 0 : index
    %c0_13 = arith.constant 0 : index
    %15 = vector.load %arg6[%c0_12, %c0_13] : memref<128x1xf32, #tpu.memory_space<vmem>>, vector<128x1xf32>
    %cst_14 = arith.constant dense<0.000000e+00> : vector<64x1xf32>
    %16 = tpu.matmul %14, %15, %cst_14 {dimension_numbers = #tpu.dot_dimension_numbers<[1], [0], [0], [1], [0, 0, 1, 1], [], []>} : vector<64x128xf32>, vector<128x1xf32>, vector<64x1xf32> -> vector<64x1xf32>
    %c0_15 = arith.constant 0 : index
    %c0_16 = arith.constant 0 : index
    %17 = vector.load %arg7[%c0_15, %c0_16] : memref<1x1xf32, #tpu.memory_space<vmem>>, vector<1x1xf32>
    %18 = vector.broadcast %17 : vector<1x1xf32> to vector<64x1xf32>
    %19 = arith.addf %16, %18 : vector<64x1xf32>
    %c0_17 = arith.constant 0 : index
    %c0_18 = arith.constant 0 : index
    %20 = vector.load %arg8[%c0_17, %c0_18] : memref<64x1xf32, #tpu.memory_space<vmem>>, vector<64x1xf32>
    tpu.vector_store %arg8[%c0_17, %c0_18], %19 {strides = array<i32>} : memref<64x1xf32, #tpu.memory_space<vmem>>, vector<64x1xf32>,
    return
  }
  func.func @transform_0(%arg0: i32) -> (i32, i32) {
    %c0_i32 = arith.constant 0 : i32
    %c0_i32_0 = arith.constant 0 : i32
    return %arg0, %c0_i32 : i32, i32
  }
  func.func @transform_1(%arg0: i32) -> (i32, i32) {
    %c0_i32 = arith.constant 0 : i32
    %c0_i32_0 = arith.constant 0 : i32
    %c0_i32_1 = arith.constant 0 : i32
    return %c0_i32, %c0_i32_0 : i32, i32
  }
  func.func @transform_2(%arg0: i32) -> (i32, i32) {
    %c0_i32 = arith.constant 0 : i32
    %c0_i32_0 = arith.constant 0 : i32
    %c0_i32_1 = arith.constant 0 : i32
    return %c0_i32, %c0_i32_0 : i32, i32
  }
  func.func @transform_3(%arg0: i32) -> (i32, i32) {
    %c0_i32 = arith.constant 0 : i32
    %c0_i32_0 = arith.constant 0 : i32
    %c0_i32_1 = arith.constant 0 : i32
    return %c0_i32, %c0_i32_0 : i32, i32
  }
  func.func @transform_4(%arg0: i32) -> (i32, i32) {
    %c0_i32 = arith.constant 0 : i32
    %c0_i32_0 = arith.constant 0 : i32
    %c0_i32_1 = arith.constant 0 : i32
    return %c0_i32, %c0_i32_0 : i32, i32
  }
  func.func @transform_5(%arg0: i32) -> (i32, i32) {
    %c0_i32 = arith.constant 0 : i32
    %c0_i32_0 = arith.constant 0 : i32
    %c0_i32_1 = arith.constant 0 : i32
    return %c0_i32, %c0_i32_0 : i32, i32
  }
  func.func @transform_6(%arg0: i32) -> (i32, i32) {
    %c0_i32 = arith.constant 0 : i32
    %c0_i32_0 = arith.constant 0 : i32
    %c0_i32_1 = arith.constant 0 : i32
    return %c0_i32, %c0_i32_0 : i32, i32
  }
  func.func @transform_7(%arg0: i32) -> (i32, i32) {
    %c0_i32 = arith.constant 0 : i32
    %c0_i32_0 = arith.constant 0 : i32
    return %arg0, %c0_i32 : i32, i32
  }
}

</mosaic_0001>

<llo_original>
// kernel: tpu_custom_call.1
$region0: #{tpu_custom_call.1}
  #allocation0 [shape = 'u32[]', space=smem, size = 0x4, offset = 0x4, fixed_abs, tag = 'smem constant byte address 0x4 - core index']
  #allocation1 [shape = 'u32[144,128]{1,0:T(1,128)}', space=vmem, size = 0x12000, scoped, tag = 'internal scratch']
  #allocation2 [shape = 'f32[1,1]{1,0:T(1,128)S(1)}', space=vmem, size = 0x200, scoped, tag = 'scoped memory for tpu_custom_call.1']
  %s0 = inlined_call_operand.vmem [shape: f32[64,32], index: 0, kind: input, shape index: {}]
  %s1 = inlined_call_operand.vmem [shape: f32[32,128], index: 1, kind: input, shape index: {}]
  %s2 = inlined_call_operand.vmem [shape: f32[1,128], index: 2, kind: input, shape index: {}]
  %s3 = inlined_call_operand.vmem [shape: f32[128,128], index: 3, kind: input, shape index: {}]
  %s4 = inlined_call_operand.vmem [shape: f32[1,128], index: 4, kind: input, shape index: {}]
  %s5 = inlined_call_operand.vmem [shape: f32[128,1], index: 5, kind: input, shape index: {}]
  %s6 = inlined_call_operand.<no memory space> [shape: f32[1,1], index: 6, kind: input, shape index: {}]
  %s7 = inlined_call_operand.vmem [shape: f32[64,1], index: 7, kind: output, shape index: {}]
  %s8 = sld [smem:[#allocation0]]
  $region38: #{tpu_custom_call.1} parent=0
    _
  %s10 = ssub.s32 1, %s8
  %s11 = scalar_select 0, %s10, %s8
  %v12 = vstv %s6
  %13 = vst [vmem:[#allocation2] sm:$0x1] %v12
  // Predicated region
  $region2: #{tpu_custom_call.1} parent=0 // pred_check
    _
  $region3: #{tpu_custom_call.1} parent=0 // pred_check_branch
    %15 = sbr.rel (0) target = $region5
  $region4: #{tpu_custom_call.1} parent=0 // pred_region
    _
  $region5: #{tpu_custom_call.1} parent=0 // pred_fallthru
    _
  // Predicated region
  $region6: #{tpu_custom_call.1} parent=0 // pred_check
    _
  $region7: #{tpu_custom_call.1} parent=0 // pred_check_branch
    %17 = sbr.rel (0) target = $region9
  $region8: #{tpu_custom_call.1} parent=0 // pred_region
    _
  $region9: #{tpu_custom_call.1} parent=0 // pred_fallthru
    _
  // Predicated region
  $region10: #{tpu_custom_call.1} parent=0 // pred_check
    _
  $region11: #{tpu_custom_call.1} parent=0 // pred_check_branch
    %19 = sbr.rel (0) target = $region13
  $region12: #{tpu_custom_call.1} parent=0 // pred_region
    _
  $region13: #{tpu_custom_call.1} parent=0 // pred_fallthru
    _
  // Predicated region
  $region14: #{tpu_custom_call.1} parent=0 // pred_check
    _
  $region15: #{tpu_custom_call.1} parent=0 // pred_check_branch
    %21 = sbr.rel (0) target = $region17
  $region16: #{tpu_custom_call.1} parent=0 // pred_region
    _
  $region17: #{tpu_custom_call.1} parent=0 // pred_fallthru
    _
  // Predicated region
  $region18: #{tpu_custom_call.1} parent=0 // pred_check
    _
  $region19: #{tpu_custom_call.1} parent=0 // pred_check_branch
    %23 = sbr.rel (0) target = $region21
  $region20: #{tpu_custom_call.1} parent=0 // pred_region
    _
  $region21: #{tpu_custom_call.1} parent=0 // pred_fallthru
    _
  // Predicated region
  $region22: #{tpu_custom_call.1} parent=0 // pred_check
    _
  $region23: #{tpu_custom_call.1} parent=0 // pred_check_branch
    %25 = sbr.rel (0) target = $region25
  $region24: #{tpu_custom_call.1} parent=0 // pred_region
    _
  $region25: #{tpu_custom_call.1} parent=0 // pred_fallthru
    _
  // Predicated region
  $region26: #{tpu_custom_call.1} parent=0 // pred_check
    _
  $region27: #{tpu_custom_call.1} parent=0 // pred_check_branch
    %27 = sbr.rel (0) target = $region29
  $region28: #{tpu_custom_call.1} parent=0 // pred_region
    _
  $region29: #{tpu_custom_call.1} parent=0 // pred_fallthru
    _
  %v28 = vld [vmem:[%s0] sm:$0xff]
  %v29 = vld [vmem:[%s0 + $0x8] sm:$0xff]
  %v30 = vld [vmem:[%s0 + $0x10] sm:$0xff]
  %v31 = vld [vmem:[%s0 + $0x18] sm:$0xff]
  %v32 = vld [vmem:[%s0 + $0x20] sm:$0xff]
  %v33 = vld [vmem:[%s0 + $0x28] sm:$0xff]
  %v34 = vld [vmem:[%s0 + $0x30] sm:$0xff]
  %v35 = vld [vmem:[%s0 + $0x38] sm:$0xff]
  %v36 = vld [vmem:[%s1] sm:$0xff]
  %v37 = vld [vmem:[%s1 + $0x8] sm:$0xff]
  %v38 = vld [vmem:[%s1 + $0x10] sm:$0xff]
  %v39 = vld [vmem:[%s1 + $0x18] sm:$0xff]
  %v40 = vld [vmem:[%s2] sm:$0x1]
  %v42 = vlaneseq
  %v43 = vshrl.u32 %v42, 7
  %v44 = vsub.s32 0, %v43
  %v45 = vrot.slane %v40, %v44
  %vm47 = vcmask 261120
  %v49 = vsel %vm47, %v28, 0
  %v52 = vsel %vm47, %v29, 0
  %v55 = vsel %vm47, %v30, 0
  %v58 = vsel %vm47, %v31, 0
  %v61 = vsel %vm47, %v32, 0
  %v64 = vsel %vm47, %v33, 0
  %v67 = vsel %vm47, %v34, 0
  %v70 = vsel %vm47, %v35, 0
  %72 = vmatprep.subr.mxu0 0.0
  %73 = vmatpush1.msra.mxu0 %v36
  %74 = vmatprep.subr.mxu0 0.0
  %75 = vmatpush1.msra.mxu0 %v37
  %76 = vmatprep.subr.mxu0 0.0
  %77 = vmatpush1.msra.mxu0 %v38
  %78 = vmatprep.subr.mxu0 0.0
  %79 = vmatpush1.msra.mxu0 %v39
  %80 = vmatprep.subr.mxu0 0.0
  %81 = vmatpush1.msra.mxu0 0.0
  %82 = vmatprep.subr.mxu0 0.0
  %83 = vmatpush1.msra.mxu0 0.0
  %84 = vmatprep.subr.mxu0 0.0
  %85 = vmatpush1.msra.mxu0 0.0
  %86 = vmatprep.subr.mxu0 0.0
  %87 = vmatpush1.msra.mxu0 0.0
  %88 = vmatprep.subr.mxu0 0.0
  %89 = vmatpush1.msra.mxu0 0.0
  %90 = vmatprep.subr.mxu0 0.0
  %91 = vmatpush1.msra.mxu0 0.0
  %92 = vmatprep.subr.mxu0 0.0
  %93 = vmatpush1.msra.mxu0 0.0
  %94 = vmatprep.subr.mxu0 0.0
  %95 = vmatpush1.msra.mxu0 0.0
  %96 = vmatprep.subr.mxu0 0.0
  %97 = vmatpush1.msra.mxu0 0.0
  %98 = vmatprep.subr.mxu0 0.0
  %99 = vmatpush1.msra.mxu0 0.0
  %100 = vmatprep.subr.mxu0 0.0
  %101 = vmatpush1.msra.mxu0 0.0
  %102 = vmatprep.subr.mxu0 0.0
  %103 = vmatpush1.msra.mxu0 0.0
  %104 = vmatprep.subr.mxu0 0.0
  %105 = vmatpush1.msra.mxu0 0.0
  %106 = vmatprep.subr.mxu0 0.0
  %107 = vmatpush1.msra.mxu0 0.0
  %108 = vmatprep.subr.mxu0 0.0
  %109 = vmatpush1.msra.mxu0 0.0
  %110 = vmatprep.subr.mxu0 0.0
  %111 = vmatpush1.msra.mxu0 0.0
  %112 = vmatprep.subr.mxu0 0.0
  %113 = vmatpush1.msra.mxu0 0.0
  %114 = vmatprep.subr.mxu0 0.0
  %115 = vmatpush1.msra.mxu0 0.0
  %116 = vmatprep.subr.mxu0 0.0
  %117 = vmatpush1.msra.mxu0 0.0
  %118 = vmatprep.subr.mxu0 0.0
  %119 = vmatpush1.msra.mxu0 0.0
  %120 = vmatprep.subr.mxu0 0.0
  %121 = vmatpush1.msra.mxu0 0.0
  %122 = vmatprep.subr.mxu0 0.0
  %123 = vmatpush1.msra.mxu0 0.0
  %124 = vmatprep.subr.mxu0 0.0
  %125 = vmatpush1.msra.mxu0 0.0
  %126 = vmatprep.subr.mxu0 0.0
  %127 = vmatpush1.msra.mxu0 0.0
  %128 = vmatprep.subr.mxu0 0.0
  %129 = vmatpush1.msra.mxu0 0.0
  %130 = vmatprep.subr.mxu0 0.0
  %131 = vmatpush1.msra.mxu0 0.0
  %132 = vmatprep.subr.mxu0 0.0
  %133 = vmatpush1.msra.mxu0 0.0
  %134 = vmatprep.subr.mxu0 0.0
  %135 = vmatpush1.msra.mxu0 0.0
  %136 = vmatprep.mubr.f32.mxu0 0.0
  %137 = vmatmul.mubr.f32.gmra.mrb[0].mxu0 %v49
  %v138 = vpop.f32.mrb[0].mxu0
  %v139 = vadd.f32 %v45, %v138
  %v140 = vpop.f32.mrb[0].mxu0
  %141 = vmatprep.mubr.f32.mxu0 0.0
  %142 = vmatmul.mubr.f32.gmra.mrb[0].mxu0 %v52
  %v143 = vpop.f32.mrb[0].mxu0
  %v144 = vadd.f32 %v45, %v143
  %v145 = vpop.f32.mrb[0].mxu0
  %146 = vmatprep.mubr.f32.mxu0 0.0
  %147 = vmatmul.mubr.f32.gmra.mrb[0].mxu0 %v55
  %v148 = vpop.f32.mrb[0].mxu0
  %v149 = vadd.f32 %v45, %v148
  %v150 = vpop.f32.mrb[0].mxu0
  %151 = vmatprep.mubr.f32.mxu0 0.0
  %152 = vmatmul.mubr.f32.gmra.mrb[0].mxu0 %v58
  %v153 = vpop.f32.mrb[0].mxu0
  %v154 = vadd.f32 %v45, %v153
  %v155 = vpop.f32.mrb[0].mxu0
  %156 = vmatprep.mubr.f32.mxu0 0.0
  %157 = vmatmul.mubr.f32.gmra.mrb[0].mxu0 %v61
  %v158 = vpop.f32.mrb[0].mxu0
  %v159 = vadd.f32 %v45, %v158
  %v160 = vpop.f32.mrb[0].mxu0
  %161 = vmatprep.mubr.f32.mxu0 0.0
  %162 = vmatmul.mubr.f32.gmra.mrb[0].mxu0 %v64
  %v163 = vpop.f32.mrb[0].mxu0
  %v164 = vadd.f32 %v45, %v163
  %v165 = vpop.f32.mrb[0].mxu0
  %166 = vmatprep.mubr.f32.mxu0 0.0
  %167 = vmatmul.mubr.f32.gmra.mrb[0].mxu0 %v67
  %v168 = vpop.f32.mrb[0].mxu0
  %v169 = vadd.f32 %v45, %v168
  %v170 = vpop.f32.mrb[0].mxu0
  %171 = vmatprep.mubr.f32.mxu0 0.0
  %172 = vmatmul.mubr.f32.gmra.mrb[0].mxu0 %v70
  %v173 = vpop.f32.mrb[0].mxu0
  %v174 = vadd.f32 %v45, %v173
  %v175 = vpop.f32.mrb[0].mxu0
  %176 = vdwg.mxu0
  %v177 = vmax.f32 %v139, 0.0
  %v178 = vmax.f32 %v144, 0.0
  %v179 = vmax.f32 %v149, 0.0
  %v180 = vmax.f32 %v154, 0.0
  %v181 = vmax.f32 %v159, 0.0
  %v182 = vmax.f32 %v164, 0.0
  %v183 = vmax.f32 %v169, 0.0
  %v184 = vmax.f32 %v174, 0.0
  %v185 = vld [vmem:[%s3] sm:$0xff]
  %v186 = vld [vmem:[%s3 + $0x8] sm:$0xff]
  %v187 = vld [vmem:[%s3 + $0x10] sm:$0xff]
  %v188 = vld [vmem:[%s3 + $0x18] sm:$0xff]
  %v189 = vld [vmem:[%s3 + $0x20] sm:$0xff]
  %v190 = vld [vmem:[%s3 + $0x28] sm:$0xff]
  %v191 = vld [vmem:[%s3 + $0x30] sm:$0xff]
  %v192 = vld [vmem:[%s3 + $0x38] sm:$0xff]
  %v193 = vld [vmem:[%s3 + $0x40] sm:$0xff]
  %v194 = vld [vmem:[%s3 + $0x48] sm:$0xff]
  %v195 = vld [vmem:[%s3 + $0x50] sm:$0xff]
  %v196 = vld [vmem:[%s3 + $0x58] sm:$0xff]
  %v197 = vld [vmem:[%s3 + $0x60] sm:$0xff]
  %v198 = vld [vmem:[%s3 + $0x68] sm:$0xff]
  %v199 = vld [vmem:[%s3 + $0x70] sm:$0xff]
  %v200 = vld [vmem:[%s3 + $0x78] sm:$0xff]
  %v201 = vld [vmem:[%s4] sm:$0x1]
  %v203 = vlaneseq
  %v204 = vshrl.u32 %v203, 7
  %v205 = vsub.s32 0, %v204
  %v206 = vrot.slane %v201, %v205
  %208 = vmatprep.subr.mxu0 0.0
  %209 = vmatpush1.msra.mxu0 %v185
  %210 = vmatprep.subr.mxu0 0.0
  %211 = vmatpush1.msra.mxu0 %v186
  %212 = vmatprep.subr.mxu0 0.0
  %213 = vmatpush1.msra.mxu0 %v187
  %214 = vmatprep.subr.mxu0 0.0
  %215 = vmatpush1.msra.mxu0 %v188
  %216 = vmatprep.subr.mxu0 0.0
  %217 = vmatpush1.msra.mxu0 %v189
  %218 = vmatprep.subr.mxu0 0.0
  %219 = vmatpush1.msra.mxu0 %v190
  %220 = vmatprep.subr.mxu0 0.0
  %221 = vmatpush1.msra.mxu0 %v191
  %222 = vmatprep.subr.mxu0 0.0
  %223 = vmatpush1.msra.mxu0 %v192
  %224 = vmatprep.subr.mxu0 0.0
  %225 = vmatpush1.msra.mxu0 %v193
  %226 = vmatprep.subr.mxu0 0.0
  %227 = vmatpush1.msra.mxu0 %v194
  %228 = vmatprep.subr.mxu0 0.0
  %229 = vmatpush1.msra.mxu0 %v195
  %230 = vmatprep.subr.mxu0 0.0
  %231 = vmatpush1.msra.mxu0 %v196
  %232 = vmatprep.subr.mxu0 0.0
  %233 = vmatpush1.msra.mxu0 %v197
  %234 = vmatprep.subr.mxu0 0.0
  %235 = vmatpush1.msra.mxu0 %v198
  %236 = vmatprep.subr.mxu0 0.0
  %237 = vmatpush1.msra.mxu0 %v199
  %238 = vmatprep.subr.mxu0 0.0
  %239 = vmatpush1.msra.mxu0 %v200
  %240 = vmatprep.subr.mxu0 0.0
  %241 = vmatpush1.msra.mxu0 0.0
  %242 = vmatprep.subr.mxu0 0.0
  %243 = vmatpush1.msra.mxu0 0.0
  %244 = vmatprep.subr.mxu0 0.0
  %245 = vmatpush1.msra.mxu0 0.0
  %246 = vmatprep.subr.mxu0 0.0
  %247 = vmatpush1.msra.mxu0 0.0
  %248 = vmatprep.subr.mxu0 0.0
  %249 = vmatpush1.msra.mxu0 0.0
  %250 = vmatprep.subr.mxu0 0.0
  %251 = vmatpush1.msra.mxu0 0.0
  %252 = vmatprep.subr.mxu0 0.0
  %253 = vmatpush1.msra.mxu0 0.0
  %254 = vmatprep.subr.mxu0 0.0
  %255 = vmatpush1.msra.mxu0 0.0
  %256 = vmatprep.subr.mxu0 0.0
  %257 = vmatpush1.msra.mxu0 0.0
  %258 = vmatprep.subr.mxu0 0.0
  %259 = vmatpush1.msra.mxu0 0.0
  %260 = vmatprep.subr.mxu0 0.0
  %261 = vmatpush1.msra.mxu0 0.0
  %262 = vmatprep.subr.mxu0 0.0
  %263 = vmatpush1.msra.mxu0 0.0
  %264 = vmatprep.subr.mxu0 0.0
  %265 = vmatpush1.msra.mxu0 0.0
  %266 = vmatprep.subr.mxu0 0.0
  %267 = vmatpush1.msra.mxu0 0.0
  %268 = vmatprep.subr.mxu0 0.0
  %269 = vmatpush1.msra.mxu0 0.0
  %270 = vmatprep.subr.mxu0 0.0
  %271 = vmatpush1.msra.mxu0 0.0
  %272 = vmatprep.mubr.f32.mxu0 0.0
  %273 = vmatmul.mubr.f32.gmra.mrb[0].mxu0 %v177
  %v274 = vpop.f32.mrb[0].mxu0
  %v275 = vadd.f32 %v206, %v274
  %v276 = vpop.f32.mrb[0].mxu0
  %277 = vmatprep.mubr.f32.mxu0 0.0
  %278 = vmatmul.mubr.f32.gmra.mrb[0].mxu0 %v178
  %v279 = vpop.f32.mrb[0].mxu0
  %v280 = vadd.f32 %v206, %v279
  %v281 = vpop.f32.mrb[0].mxu0
  %282 = vmatprep.mubr.f32.mxu0 0.0
  %283 = vmatmul.mubr.f32.gmra.mrb[0].mxu0 %v179
  %v284 = vpop.f32.mrb[0].mxu0
  %v285 = vadd.f32 %v206, %v284
  %v286 = vpop.f32.mrb[0].mxu0
  %287 = vmatprep.mubr.f32.mxu0 0.0
  %288 = vmatmul.mubr.f32.gmra.mrb[0].mxu0 %v180
  %v289 = vpop.f32.mrb[0].mxu0
  %v290 = vadd.f32 %v206, %v289
  %v291 = vpop.f32.mrb[0].mxu0
  %292 = vmatprep.mubr.f32.mxu0 0.0
  %293 = vmatmul.mubr.f32.gmra.mrb[0].mxu0 %v181
  %v294 = vpop.f32.mrb[0].mxu0
  %v295 = vadd.f32 %v206, %v294
  %v296 = vpop.f32.mrb[0].mxu0
  %297 = vmatprep.mubr.f32.mxu0 0.0
  %298 = vmatmul.mubr.f32.gmra.mrb[0].mxu0 %v182
  %v299 = vpop.f32.mrb[0].mxu0
  %v300 = vadd.f32 %v206, %v299
  %v301 = vpop.f32.mrb[0].mxu0
  %302 = vmatprep.mubr.f32.mxu0 0.0
  %303 = vmatmul.mubr.f32.gmra.mrb[0].mxu0 %v183
  %v304 = vpop.f32.mrb[0].mxu0
  %v305 = vadd.f32 %v206, %v304
  %v306 = vpop.f32.mrb[0].mxu0
  %307 = vmatprep.mubr.f32.mxu0 0.0
  %308 = vmatmul.mubr.f32.gmra.mrb[0].mxu0 %v184
  %v309 = vpop.f32.mrb[0].mxu0
  %v310 = vadd.f32 %v206, %v309
  %v311 = vpop.f32.mrb[0].mxu0
  %312 = vdwg.mxu0
  %v313 = vmax.f32 %v275, 0.0
  %v314 = vmax.f32 %v280, 0.0
  %v315 = vmax.f32 %v285, 0.0
  %v316 = vmax.f32 %v290, 0.0
  %v317 = vmax.f32 %v295, 0.0
  %v318 = vmax.f32 %v300, 0.0
  %v319 = vmax.f32 %v305, 0.0
  %v320 = vmax.f32 %v310, 0.0
  %v321 = vld [vmem:[%s5] sm:$0xff]
  %v322 = vld [vmem:[%s5 + $0x8] sm:$0xff]
  %v323 = vld [vmem:[%s5 + $0x10] sm:$0xff]
  %v324 = vld [vmem:[%s5 + $0x18] sm:$0xff]
  %v325 = vld [vmem:[%s5 + $0x20] sm:$0xff]
  %v326 = vld [vmem:[%s5 + $0x28] sm:$0xff]
  %v327 = vld [vmem:[%s5 + $0x30] sm:$0xff]
  %v328 = vld [vmem:[%s5 + $0x38] sm:$0xff]
  %v329 = vld [vmem:[%s5 + $0x40] sm:$0xff]
  %v330 = vld [vmem:[%s5 + $0x48] sm:$0xff]
  %v331 = vld [vmem:[%s5 + $0x50] sm:$0xff]
  %v332 = vld [vmem:[%s5 + $0x58] sm:$0xff]
  %v333 = vld [vmem:[%s5 + $0x60] sm:$0xff]
  %v334 = vld [vmem:[%s5 + $0x68] sm:$0xff]
  %v335 = vld [vmem:[%s5 + $0x70] sm:$0xff]
  %v336 = vld [vmem:[%s5 + $0x78] sm:$0xff]
  %v337 = vld [vmem:[#allocation2] sm:$0x1]
  %v339 = vlaneseq
  %v340 = vshrl.u32 %v339, 7
  %v341 = vsub.s32 0, %v340
  %v342 = vrot.slane %v337, %v341
  %344 = vmatprep.subr.mxu0 0.0
  %345 = vmatpush1.msra.mxu0 %v321
  %346 = vmatprep.subr.mxu0 0.0
  %347 = vmatpush1.msra.mxu0 %v322
  %348 = vmatprep.subr.mxu0 0.0
  %349 = vmatpush1.msra.mxu0 %v323
  %350 = vmatprep.subr.mxu0 0.0
  %351 = vmatpush1.msra.mxu0 %v324
  %352 = vmatprep.subr.mxu0 0.0
  %353 = vmatpush1.msra.mxu0 %v325
  %354 = vmatprep.subr.mxu0 0.0
  %355 = vmatpush1.msra.mxu0 %v326
  %356 = vmatprep.subr.mxu0 0.0
  %357 = vmatpush1.msra.mxu0 %v327
  %358 = vmatprep.subr.mxu0 0.0
  %359 = vmatpush1.msra.mxu0 %v328
  %360 = vmatprep.subr.mxu0 0.0
  %361 = vmatpush1.msra.mxu0 %v329
  %362 = vmatprep.subr.mxu0 0.0
  %363 = vmatpush1.msra.mxu0 %v330
  %364 = vmatprep.subr.mxu0 0.0
  %365 = vmatpush1.msra.mxu0 %v331
  %366 = vmatprep.subr.mxu0 0.0
  %367 = vmatpush1.msra.mxu0 %v332
  %368 = vmatprep.subr.mxu0 0.0
  %369 = vmatpush1.msra.mxu0 %v333
  %370 = vmatprep.subr.mxu0 0.0
  %371 = vmatpush1.msra.mxu0 %v334
  %372 = vmatprep.subr.mxu0 0.0
  %373 = vmatpush1.msra.mxu0 %v335
  %374 = vmatprep.subr.mxu0 0.0
  %375 = vmatpush1.msra.mxu0 %v336
  %376 = vmatprep.subr.mxu0 0.0
  %377 = vmatpush1.msra.mxu0 0.0
  %378 = vmatprep.subr.mxu0 0.0
  %379 = vmatpush1.msra.mxu0 0.0
  %380 = vmatprep.subr.mxu0 0.0
  %381 = vmatpush1.msra.mxu0 0.0
  %382 = vmatprep.subr.mxu0 0.0
  %383 = vmatpush1.msra.mxu0 0.0
  %384 = vmatprep.subr.mxu0 0.0
  %385 = vmatpush1.msra.mxu0 0.0
  %386 = vmatprep.subr.mxu0 0.0
  %387 = vmatpush1.msra.mxu0 0.0
  %388 = vmatprep.subr.mxu0 0.0
  %389 = vmatpush1.msra.mxu0 0.0
  %390 = vmatprep.subr.mxu0 0.0
  %391 = vmatpush1.msra.mxu0 0.0
  %392 = vmatprep.subr.mxu0 0.0
  %393 = vmatpush1.msra.mxu0 0.0
  %394 = vmatprep.subr.mxu0 0.0
  %395 = vmatpush1.msra.mxu0 0.0
  %396 = vmatprep.subr.mxu0 0.0
  %397 = vmatpush1.msra.mxu0 0.0
  %398 = vmatprep.subr.mxu0 0.0
  %399 = vmatpush1.msra.mxu0 0.0
  %400 = vmatprep.subr.mxu0 0.0
  %401 = vmatpush1.msra.mxu0 0.0
  %402 = vmatprep.subr.mxu0 0.0
  %403 = vmatpush1.msra.mxu0 0.0
  %404 = vmatprep.subr.mxu0 0.0
  %405 = vmatpush1.msra.mxu0 0.0
  %406 = vmatprep.subr.mxu0 0.0
  %407 = vmatpush1.msra.mxu0 0.0
  %408 = vmatprep.mubr.f32.mxu0 0.0
  %409 = vmatmul.mubr.f32.gmra.mrb[0].mxu0 %v313
  %v410 = vpop.f32.mrb[0].mxu0
  %v411 = vadd.f32 %v342, %v410
  %v412 = vpop.f32.mrb[0].mxu0
  %413 = vmatprep.mubr.f32.mxu0 0.0
  %414 = vmatmul.mubr.f32.gmra.mrb[0].mxu0 %v314
  %v415 = vpop.f32.mrb[0].mxu0
  %v416 = vadd.f32 %v342, %v415
  %v417 = vpop.f32.mrb[0].mxu0
  %418 = vmatprep.mubr.f32.mxu0 0.0
  %419 = vmatmul.mubr.f32.gmra.mrb[0].mxu0 %v315
  %v420 = vpop.f32.mrb[0].mxu0
  %v421 = vadd.f32 %v342, %v420
  %v422 = vpop.f32.mrb[0].mxu0
  %423 = vmatprep.mubr.f32.mxu0 0.0
  %424 = vmatmul.mubr.f32.gmra.mrb[0].mxu0 %v316
  %v425 = vpop.f32.mrb[0].mxu0
  %v426 = vadd.f32 %v342, %v425
  %v427 = vpop.f32.mrb[0].mxu0
  %428 = vmatprep.mubr.f32.mxu0 0.0
  %429 = vmatmul.mubr.f32.gmra.mrb[0].mxu0 %v317
  %v430 = vpop.f32.mrb[0].mxu0
  %v431 = vadd.f32 %v342, %v430
  %v432 = vpop.f32.mrb[0].mxu0
  %433 = vmatprep.mubr.f32.mxu0 0.0
  %434 = vmatmul.mubr.f32.gmra.mrb[0].mxu0 %v318
  %v435 = vpop.f32.mrb[0].mxu0
  %v436 = vadd.f32 %v342, %v435
  %v437 = vpop.f32.mrb[0].mxu0
  %438 = vmatprep.mubr.f32.mxu0 0.0
  %439 = vmatmul.mubr.f32.gmra.mrb[0].mxu0 %v319
  %v440 = vpop.f32.mrb[0].mxu0
  %v441 = vadd.f32 %v342, %v440
  %v442 = vpop.f32.mrb[0].mxu0
  %443 = vmatprep.mubr.f32.mxu0 0.0
  %444 = vmatmul.mubr.f32.gmra.mrb[0].mxu0 %v320
  %v445 = vpop.f32.mrb[0].mxu0
  %v446 = vadd.f32 %v342, %v445
  %v447 = vpop.f32.mrb[0].mxu0
  %448 = vdwg.mxu0
  %vm449 = vcmask 7168
  %450 = vst.msk [vmem:[%s7] sm:$0xff] %vm449, %v411
  %451 = vst.msk [vmem:[%s7 + $0x8] sm:$0xff] %vm449, %v416
  %452 = vst.msk [vmem:[%s7 + $0x10] sm:$0xff] %vm449, %v421
  %453 = vst.msk [vmem:[%s7 + $0x18] sm:$0xff] %vm449, %v426
  %454 = vst.msk [vmem:[%s7 + $0x20] sm:$0xff] %vm449, %v431
  %455 = vst.msk [vmem:[%s7 + $0x28] sm:$0xff] %vm449, %v436
  %456 = vst.msk [vmem:[%s7 + $0x30] sm:$0xff] %vm449, %v441
  %457 = vst.msk [vmem:[%s7 + $0x38] sm:$0xff] %vm449, %v446
  // Predicated region
  $region30: #{tpu_custom_call.1} parent=0 // pred_check
    _
  $region31: #{tpu_custom_call.1} parent=0 // pred_check_branch
    %459 = sbr.rel (0) target = $region33
  $region32: #{tpu_custom_call.1} parent=0 // pred_region
    _
  $region33: #{tpu_custom_call.1} parent=0 // pred_fallthru
    _
  // Predicated region
  $region34: #{tpu_custom_call.1} parent=0 // pred_check
    _
  $region35: #{tpu_custom_call.1} parent=0 // pred_check_branch
    %461 = sbr.rel (0) target = $region37
  $region36: #{tpu_custom_call.1} parent=0 // pred_region
    _
  $region37: #{tpu_custom_call.1} parent=0 // pred_fallthru
    _

</llo_original>
